<compile_context>
chip_gen: v7x
topology: tpu7x:2x2x1
jax: 0.10.0
libtpu: 0.0.40
codegen_flags: <defaults>
</compile_context>

<pallas_src>
import functools

import numpy as np
import jax
import jax.numpy as jnp
from jax.experimental import pallas as pl
from jax.experimental.pallas import tpu as pltpu

_LANES = 128


# ---------------------------------------------------------------------------
# Fused kernel: broadcast multiply-add + clamp + noise  (pure VPU, no decode)
# ---------------------------------------------------------------------------
def _make_kernel(min_value, max_value):
    def kernel(xg_ref, wg_ref, b_ref, n_ref, o_ref):
        # xg_ref: (1, P)      f32  gathered input pixel per output lane
        # wg_ref: (C_out, P)  f32  gathered weight tap  per output lane
        # b_ref : (C_out, 1)  f32  bias
        # n_ref : (1, P)      f32  per-spatial noise (broadcast over channels)
        # o_ref : (C_out, P)  f32  channel-major flat output (lane-dense)
        acc = xg_ref[...] * wg_ref[...] + b_ref[...]   # conv-transpose + bias
        acc = jnp.maximum(acc, min_value)              # clamp_min
        acc = jnp.minimum(acc, max_value)              # clamp_max
        o_ref[...] = acc + n_ref[...]                  # noise add
    return kernel


# ---------------------------------------------------------------------------
# Wrapper: all index decode / gathers done at trace time with static indices
# ---------------------------------------------------------------------------
@functools.partial(jax.jit,
                   static_argnames=("stride", "padding", "min_value", "max_value"))
def model_forward(x, weight, bias, noise, *, stride=2, padding=2,
                  min_value=100.0, max_value=1000.0):
    N, C_in, H_in, W_in = x.shape
    C_in_w, C_out, K, K2 = weight.shape
    assert N == 1 and C_in == 1 and C_in_w == 1 and K == K2
    assert stride == K, "kernel specialization assumes stride == kernel_size"

    H_out = (H_in - 1) * stride - 2 * padding + K
    W_out = (W_in - 1) * stride - 2 * padding + K
    HW = H_out * W_out
    P = max(_LANES, ((HW + _LANES - 1) // _LANES) * _LANES)  # lane-dense width

    # ---- static (numpy, trace-time) one-tap-per-output index decode --------
    p_idx = np.arange(HW)
    oh = p_idx // W_out
    ow = p_idx % W_out
    ih = (oh + padding) // stride
    kh = (oh + padding) - ih * stride
    iw = (ow + padding) // stride
    kw = (ow + padding) - iw * stride
    valid = (ih >= 0) & (ih < H_in) & (iw >= 0) & (iw < W_in)
    src = np.clip(ih, 0, H_in - 1) * W_in + np.clip(iw, 0, W_in - 1)  # flat src
    kk = kh * K + kw                                                   # flat tap

    pad = P - HW
    src_p = np.concatenate([src, np.zeros(pad, dtype=src.dtype)])
    kk_p = np.concatenate([kk, np.zeros(pad, dtype=kk.dtype)])
    valid_p = np.concatenate([valid.astype(np.float32),
                              np.zeros(pad, np.float32)])

    # ---- wrapper-side gathers with static indices (cheap XLA gathers) ------
    x_flat = x.reshape(1, H_in * W_in).astype(jnp.float32)
    xg = x_flat[:, src_p] * jnp.asarray(valid_p)[None, :]     # (1, P)
    w_mat = weight.reshape(C_out, K * K).astype(jnp.float32)  # w[c, kh*K+kw]
    wg = w_mat[:, kk_p]                                        # (C_out, P)
    b_col = bias.reshape(C_out, 1).astype(jnp.float32)         # (C_out, 1)
    n_pad = jnp.zeros((1, P), jnp.float32).at[:, :HW].set(
        noise.reshape(1, HW).astype(jnp.float32))              # (1, P)

    kernel = _make_kernel(float(min_value), float(max_value))
    out2d = pl.pallas_call(
        kernel,
        out_shape=jax.ShapeDtypeStruct((C_out, P), jnp.float32),
        in_specs=[
            pl.BlockSpec(memory_space=pltpu.MemorySpace.VMEM),  # xg
            pl.BlockSpec(memory_space=pltpu.MemorySpace.VMEM),  # wg
            pl.BlockSpec(memory_space=pltpu.MemorySpace.VMEM),  # bias
            pl.BlockSpec(memory_space=pltpu.MemorySpace.VMEM),  # noise
        ],
        out_specs=pl.BlockSpec(memory_space=pltpu.MemorySpace.VMEM),
    )(xg, wg, b_col, n_pad)

    # (C_out, P) -> slice valid lanes -> (1, C_out, H_out, W_out)
    return out2d[:, :HW].reshape(1, C_out, H_out, W_out)


if __name__ == "__main__":
    key = jax.random.PRNGKey(0)
    k_x, k_w, k_b, k_n = jax.random.split(key, 4)

    # Shapes implied by the module: x1 = randn(1, 1, 5, 5)
    x1 = jax.random.normal(k_x, (1, 1, 5, 5), dtype=jnp.float32)

    # ConvTranspose2d(1, 16, 2, stride=2, padding=2) parameters
    # (deterministic init; PyTorch layout weight = (C_in, C_out, K, K))
    fan_in = 1 * 2 * 2
    bound = 1.0 / (fan_in ** 0.5)
    weight = jax.random.uniform(k_w, (1, 16, 2, 2), jnp.float32, -bound, bound)
    bias = jax.random.uniform(k_b, (16,), jnp.float32, -bound, bound)

    # v4 = torch.rand(...) -> uniform [0, 1) noise (see TODO note on shape).
    noise = jax.random.uniform(k_n, (1, 1, 6, 6), jnp.float32)

    out = model_forward(x1, weight, bias, noise)
    out = jax.block_until_ready(out)
    assert out.shape == (1, 16, 6, 6), out.shape

    # Numpy reference (scatter form of ConvTranspose2d) + clamp + noise.
    xn = np.asarray(x1)[0, 0]
    wn = np.asarray(weight)[0]                # (16, 2, 2)
    bn = np.asarray(bias)
    nz = np.asarray(noise)[0, 0]
    stride, padding, K = 2, 2, 2
    full = np.zeros((16, (5 - 1) * stride + K, (5 - 1) * stride + K), np.float32)
    for ih_ in range(5):
        for iw_ in range(5):
            for kh_ in range(K):
                for kw_ in range(K):
                    full[:, ih_ * stride + kh_, iw_ * stride + kw_] += (
                        xn[ih_, iw_] * wn[:, kh_, kw_])
    conv = full[:, padding:padding + 6, padding:padding + 6] + bn[:, None, None]
    ref = np.clip(conv, 100.0, 1000.0) + nz[None, :, :]
    np.testing.assert_allclose(np.asarray(out)[0], ref, rtol=1e-5, atol=1e-5)

    print("KERNEL_OK")
</pallas_src>

<mosaic_0001>
module attributes {stable_mosaic.version = 11 : i64} {
  func.func @kernel(%arg0: memref<1x128xf32, #tpu.memory_space<vmem>>, %arg1: memref<16x128xf32, #tpu.memory_space<vmem>>, %arg2: memref<16x1xf32, #tpu.memory_space<vmem>>, %arg3: memref<1x128xf32, #tpu.memory_space<vmem>>, %arg4: memref<16x128xf32, #tpu.memory_space<vmem>>) attributes {dimension_semantics = [], scalar_prefetch = 0 : i64, scratch_operands = 0 : i64, tpu.core_type = #tpu.core_type<tc>} {
    %c0 = arith.constant 0 : index
    %c0_0 = arith.constant 0 : index
    %0 = vector.load %arg0[%c0, %c0_0] : memref<1x128xf32, #tpu.memory_space<vmem>>, vector<1x128xf32>
    %c0_1 = arith.constant 0 : index
    %c0_2 = arith.constant 0 : index
    %1 = vector.load %arg1[%c0_1, %c0_2] : memref<16x128xf32, #tpu.memory_space<vmem>>, vector<16x128xf32>
    %2 = vector.broadcast %0 : vector<1x128xf32> to vector<16x128xf32>
    %3 = arith.mulf %2, %1 : vector<16x128xf32>
    %c0_3 = arith.constant 0 : index
    %c0_4 = arith.constant 0 : index
    %4 = vector.load %arg2[%c0_3, %c0_4] : memref<16x1xf32, #tpu.memory_space<vmem>>, vector<16x1xf32>
    %5 = vector.broadcast %4 : vector<16x1xf32> to vector<16x128xf32>
    %6 = arith.addf %3, %5 : vector<16x128xf32>
    %cst = arith.constant 1.000000e+02 : f32
    %7 = vector.broadcast %cst : f32 to vector<16x128xf32>
    %8 = arith.maximumf %6, %7 : vector<16x128xf32>
    %cst_5 = arith.constant 1.000000e+03 : f32
    %9 = vector.broadcast %cst_5 : f32 to vector<16x128xf32>
    %10 = arith.minimumf %8, %9 : vector<16x128xf32>
    %c0_6 = arith.constant 0 : index
    %c0_7 = arith.constant 0 : index
    %11 = vector.load %arg3[%c0_6, %c0_7] : memref<1x128xf32, #tpu.memory_space<vmem>>, vector<1x128xf32>
    %12 = vector.broadcast %11 : vector<1x128xf32> to vector<16x128xf32>
    %13 = arith.addf %10, %12 : vector<16x128xf32>
    %c0_8 = arith.constant 0 : index
    %c0_9 = arith.constant 0 : index
    %14 = vector.load %arg4[%c0_8, %c0_9] : memref<16x128xf32, #tpu.memory_space<vmem>>, vector<16x128xf32>
    tpu.vector_store %arg4[%c0_8, %c0_9], %13 {strides = array<i32>} : memref<16x128xf32, #tpu.memory_space<vmem>>, vector<16x128xf32>,
    return
  }
}

</mosaic_0001>

<llo_original>
// kernel: model_forward.1
$region0: #{model_forward.1}
  #allocation0 [shape = 'u32[]', space=smem, size = 0x4, offset = 0x4, fixed_abs, tag = 'smem constant byte address 0x4 - core index']
  #allocation1 [shape = 'u32[144,128]{1,0:T(1,128)}', space=vmem, size = 0x12000, scoped, tag = 'internal scratch']
  %s0 = inlined_call_operand.vmem [shape: f32[1,128], index: 0, kind: input, shape index: {}]
  %s1 = inlined_call_operand.vmem [shape: f32[16,128], index: 1, kind: input, shape index: {}]
  %s2 = inlined_call_operand.vmem [shape: f32[16,1], index: 2, kind: input, shape index: {}]
  %s3 = inlined_call_operand.vmem [shape: f32[1,128], index: 3, kind: input, shape index: {}]
  %s4 = inlined_call_operand.vmem [shape: f32[16,128], index: 4, kind: output, shape index: {}]
  %s5 = sld [smem:[#allocation0]]
  $region26: #{model_forward.1} parent=0
    _
  %s7 = ssub.s32 1, %s5
  %s8 = scalar_select 0, %s7, %s5
  // Predicated region
  $region2: #{model_forward.1} parent=0 // pred_check
    _
  $region3: #{model_forward.1} parent=0 // pred_check_branch
    %10 = sbr.rel (0) target = $region5
  $region4: #{model_forward.1} parent=0 // pred_region
    _
  $region5: #{model_forward.1} parent=0 // pred_fallthru
    _
  // Predicated region
  $region6: #{model_forward.1} parent=0 // pred_check
    _
  $region7: #{model_forward.1} parent=0 // pred_check_branch
    %12 = sbr.rel (0) target = $region9
  $region8: #{model_forward.1} parent=0 // pred_region
    _
  $region9: #{model_forward.1} parent=0 // pred_fallthru
    _
  // Predicated region
  $region10: #{model_forward.1} parent=0 // pred_check
    _
  $region11: #{model_forward.1} parent=0 // pred_check_branch
    %14 = sbr.rel (0) target = $region13
  $region12: #{model_forward.1} parent=0 // pred_region
    _
  $region13: #{model_forward.1} parent=0 // pred_fallthru
    _
  // Predicated region
  $region14: #{model_forward.1} parent=0 // pred_check
    _
  $region15: #{model_forward.1} parent=0 // pred_check_branch
    %16 = sbr.rel (0) target = $region17
  $region16: #{model_forward.1} parent=0 // pred_region
    _
  $region17: #{model_forward.1} parent=0 // pred_fallthru
    _
  %v17 = vld [vmem:[%s0] sm:$0x1]
  %v18 = vld [vmem:[%s1] sm:$0xff]
  %v19 = vld [vmem:[%s1 + $0x8] sm:$0xff]
  %v21 = vlaneseq
  %v22 = vshrl.u32 %v21, 7
  %v23 = vsub.s32 0, %v22
  %v24 = vrot.slane %v17, %v23
  %v26 = vmul.f32 %v24, %v18
  %v27 = vmul.f32 %v24, %v19
  %v28 = vld [vmem:[%s2] sm:$0xff]
  %v29 = vld [vmem:[%s2 + $0x8] sm:$0xff]
  %31 = vset.pattern.permute.xlu0 0
  %32 = vperm.xlu0 %31, %v28
  %v33 = vpop.permute.xlu0 %32
  %36 = vset.pattern.permute.xlu0 0
  %37 = vperm.xlu0 %36, %v29
  %v38 = vpop.permute.xlu0 %37
  %v40 = vadd.f32 %v26, %v33
  %v41 = vadd.f32 %v27, %v38
  %v42 = vmax.f32 %v40, 100.0
  %v43 = vmax.f32 %v41, 100.0
  %v44 = vmin.f32 %v42, 1000.0
  %v45 = vmin.f32 %v43, 1000.0
  %v46 = vld [vmem:[%s3] sm:$0x1]
  %v48 = vlaneseq
  %v49 = vshrl.u32 %v48, 7
  %v50 = vsub.s32 0, %v49
  %v51 = vrot.slane %v46, %v50
  %v53 = vadd.f32 %v44, %v51
  %v54 = vadd.f32 %v45, %v51
  %55 = vst [vmem:[%s4] sm:$0xff] %v53
  %56 = vst [vmem:[%s4 + $0x8] sm:$0xff] %v54
  // Predicated region
  $region18: #{model_forward.1} parent=0 // pred_check
    _
  $region19: #{model_forward.1} parent=0 // pred_check_branch
    %58 = sbr.rel (0) target = $region21
  $region20: #{model_forward.1} parent=0 // pred_region
    _
  $region21: #{model_forward.1} parent=0 // pred_fallthru
    _
  // Predicated region
  $region22: #{model_forward.1} parent=0 // pred_check
    _
  $region23: #{model_forward.1} parent=0 // pred_check_branch
    %60 = sbr.rel (0) target = $region25
  $region24: #{model_forward.1} parent=0 // pred_region
    _
  $region25: #{model_forward.1} parent=0 // pred_fallthru
    _

</llo_original>
